<compile_context>
chip_gen: v7x
topology: tpu7x:2x2x1
jax: 0.10.0
libtpu: 0.0.40
codegen_flags: <defaults>
</compile_context>

<pallas_src>
import math

import jax
import jax.numpy as jnp
from jax.experimental import pallas as pl
from jax.experimental.pallas import tpu as pltpu


def _round_up(x, m):
    return ((x + m - 1) // m) * m


# ----------------------------- kernels -----------------------------
# Reduction (K tiled) variants: grid = (i, j, k), K last ("arbitrary"),
# f32 accumulator scratch persists across k; bias add + writeback only in
# the epilogue so the inner loop is pure MXU matmul-accumulate.

def _mm_kernel_bias(x_ref, w_ref, b_ref, o_ref, acc_ref):
    k = pl.program_id(2)

    @pl.when(k == 0)
    def _init():
        acc_ref[...] = jnp.zeros_like(acc_ref)

    acc_ref[...] += jnp.dot(x_ref[...], w_ref[...], preferred_element_type=jnp.float32)

    @pl.when(k == pl.num_programs(2) - 1)
    def _finalize():
        # bias is pre-cast to f32 outside the kernel -> single add on the accumulator.
        o_ref[...] = (acc_ref[...] + b_ref[...]).astype(o_ref.dtype)


def _mm_kernel_nobias(x_ref, w_ref, o_ref, acc_ref):
    k = pl.program_id(2)

    @pl.when(k == 0)
    def _init():
        acc_ref[...] = jnp.zeros_like(acc_ref)

    acc_ref[...] += jnp.dot(x_ref[...], w_ref[...], preferred_element_type=jnp.float32)

    @pl.when(k == pl.num_programs(2) - 1)
    def _finalize():
        o_ref[...] = acc_ref[...].astype(o_ref.dtype)


# Single-K-tile variants: no reduction axis, no accumulator scratch, fewer
# grid steps (per-step overhead ~0.35us) and no acc read/modify/write traffic.

def _mm_kernel_bias_1k(x_ref, w_ref, b_ref, o_ref):
    o_ref[...] = (
        jnp.dot(x_ref[...], w_ref[...], preferred_element_type=jnp.float32) + b_ref[...]
    ).astype(o_ref.dtype)


def _mm_kernel_nobias_1k(x_ref, w_ref, o_ref):
    o_ref[...] = jnp.dot(
        x_ref[...], w_ref[...], preferred_element_type=jnp.float32
    ).astype(o_ref.dtype)


# ----------------------------- wrapper -----------------------------

def _pick_tiles(M, N, K, dtype):
    # bf16 packs 16 rows per sublane-pair; f32 needs multiples of 8.
    sub = 16 if dtype == jnp.bfloat16 else 8
    # Sized so double-buffered x/w/o tiles + f32 accumulator stay ~8 MiB:
    # inside the 16 MiB (v5e) / 32 MiB (v6e, v7x) scoped VMEM defaults and
    # well under v7x's 64 MiB physical VMEM.
    tm = min(256, _round_up(M, sub))
    tn = min(512, _round_up(N, 128))
    tk = min(1024, _round_up(K, 128))
    return tm, tn, tk


def mixed_linear_pallas(x, weight, bias=None, *, tm=None, tn=None, tk=None):
    M, K = x.shape
    Kw, N = weight.shape
    assert K == Kw, f"shape mismatch: x {x.shape} vs weight {weight.shape}"
    out_dtype = x.dtype

    dtm, dtn, dtk = _pick_tiles(M, N, K, x.dtype)
    tm = tm or dtm
    tn = tn or dtn
    tk = tk or dtk

    # Pad every dim to a tile multiple: handles arbitrary M/N/K (no silent
    # tail-row drop), satisfies the (8/16, 128) block alignment rule and keeps
    # the output spec lane-dense (unmasked vst).
    Mp, Np, Kp = _round_up(M, tm), _round_up(N, tn), _round_up(K, tk)
    xp = x if (Mp == M and Kp == K) else jnp.pad(x, ((0, Mp - M), (0, Kp - K)))
    wp = weight if (Kp == K and Np == N) else jnp.pad(weight, ((0, Kp - K), (0, Np - N)))

    has_bias = bias is not None
    if has_bias:
        b = bias.astype(jnp.float32)
        if Np != N:
            b = jnp.pad(b, (0, Np - N))
        bp = b.reshape(1, Np)

    gm, gn, gk = Mp // tm, Np // tn, Kp // tk
    single_k = gk == 1

    # Advisory cost hint for XLA's scheduler around the custom call.
    itemsize = jnp.dtype(x.dtype).itemsize
    cost = pl.CostEstimate(
        flops=2 * Mp * Np * Kp,
        transcendentals=0,
        bytes_accessed=int((Mp * Kp + Kp * Np + Mp * Np) * itemsize),
    )

    if single_k:
        grid = (gm, gn)
        x_spec = pl.BlockSpec((tm, tk), lambda i, j: (i, 0))
        w_spec = pl.BlockSpec((tk, tn), lambda i, j: (0, j))
        b_spec = pl.BlockSpec((1, tn), lambda i, j: (0, j))
        o_spec = pl.BlockSpec((tm, tn), lambda i, j: (i, j))
        semantics = ("parallel", "parallel")
        scratch = []
        kernel = _mm_kernel_bias_1k if has_bias else _mm_kernel_nobias_1k
    else:
        grid = (gm, gn, gk)
        x_spec = pl.BlockSpec((tm, tk), lambda i, j, k: (i, k))
        w_spec = pl.BlockSpec((tk, tn), lambda i, j, k: (k, j))
        b_spec = pl.BlockSpec((1, tn), lambda i, j, k: (0, j))
        o_spec = pl.BlockSpec((tm, tn), lambda i, j, k: (i, j))
        semantics = ("parallel", "parallel", "arbitrary")
        scratch = [pltpu.VMEM((tm, tn), jnp.float32)]
        kernel = _mm_kernel_bias if has_bias else _mm_kernel_nobias

    in_specs = [x_spec, w_spec] + ([b_spec] if has_bias else [])
    args = (xp, wp, bp) if has_bias else (xp, wp)

    out = pl.pallas_call(
        kernel,
        out_shape=jax.ShapeDtypeStruct((Mp, Np), out_dtype),
        grid_spec=pltpu.PrefetchScalarGridSpec(
            num_scalar_prefetch=0,
            grid=grid,
            in_specs=in_specs,
            out_specs=o_spec,
            scratch_shapes=scratch,
        ),
        compiler_params=pltpu.CompilerParams(dimension_semantics=semantics),
        cost_estimate=cost,
    )(*args)

    if Mp != M or Np != N:
        out = out[:M, :N]
    return out


def mixed_linear(x, weight, bias=None, *, allow_small_fallback=True, **tile_kwargs):
    """Dense MixedLinear.forward: x @ weight + bias.

    For tiny problems the custom-call / DMA overhead dwarfs the matmul, so we
    dispatch to XLA's fused dot below a FLOP threshold (can be disabled).
    """
    M, K = x.shape
    _, N = weight.shape
    if allow_small_fallback and (M * N * K) < (1 << 18):
        res = jnp.dot(x, weight, preferred_element_type=jnp.float32).astype(x.dtype)
        if bias is not None:
            res = res + bias.astype(res.dtype)[None, :]
        return res
    return mixed_linear_pallas(x, weight, bias, **tile_kwargs)


def init_params(key, in_features, out_features):
    # Mirrors kaiming_uniform_(weight, mode='fan_out', a=sqrt(5)) on a
    # (in_features, out_features) weight: fan_out = in_features.
    kw, kb = jax.random.split(key)
    a = math.sqrt(5.0)
    gain = math.sqrt(2.0 / (1.0 + a * a))
    fan_out = in_features
    w_bound = gain * math.sqrt(3.0 / fan_out)
    weight = jax.random.uniform(
        kw, (in_features, out_features), jnp.float32, -w_bound, w_bound
    )
    b_bound = 1.0 / math.sqrt(in_features)
    bias = jax.random.uniform(kb, (out_features,), jnp.float32, -b_bound, b_bound)
    return weight, bias


if __name__ == "__main__":
    key = jax.random.PRNGKey(0)
    k_x, k_p, k_x2, k_p2, k_x3, k_p3 = jax.random.split(key, 6)

    # --- Case 1: the module's toy shape; force the Pallas path (fallback off).
    batch, in_features, out_features = 16, 32, 64
    x = jax.random.normal(k_x, (batch, in_features), jnp.float32)
    weight, bias = init_params(k_p, in_features, out_features)

    out = mixed_linear(x, weight, bias, allow_small_fallback=False)
    out = jax.block_until_ready(out)
    ref = x @ weight + bias[None, :]
    assert out.shape == (batch, out_features)
    assert jnp.allclose(out, ref, atol=1e-5, rtol=1e-5), "mismatch vs reference (case 1)"

    # --- Case 2: non-tile-aligned shape to exercise the padded/tail path.
    M2, K2, N2 = 20, 33, 70
    x2 = jax.random.normal(k_x2, (M2, K2), jnp.float32)
    w2, b2 = init_params(k_p2, K2, N2)
    out2 = jax.block_until_ready(mixed_linear(x2, w2, b2, allow_small_fallback=False))
    ref2 = x2 @ w2 + b2[None, :]
    assert out2.shape == (M2, N2)
    assert jnp.allclose(out2, ref2, atol=1e-5, rtol=1e-5), "mismatch vs reference (case 2)"

    # --- Case 3: no-bias path (matches bias=None branch of the module).
    out3 = jax.block_until_ready(mixed_linear(x, weight, None, allow_small_fallback=False))
    assert jnp.allclose(out3, x @ weight, atol=1e-5, rtol=1e-5), "mismatch (no-bias)"

    # --- Case 4: force the multi-K-tile reduction path (tk < K).
    M4, K4, N4 = 64, 256, 128
    x4 = jax.random.normal(k_x3, (M4, K4), jnp.float32)
    w4, b4 = init_params(k_p3, K4, N4)
    out4 = jax.block_until_ready(
        mixed_linear(x4, w4, b4, allow_small_fallback=False, tm=64, tn=128, tk=128)
    )
    ref4 = x4 @ w4 + b4[None, :]
    assert jnp.allclose(out4, ref4, atol=1e-4, rtol=1e-5), "mismatch (K-reduction path)"

    print("KERNEL_OK")
</pallas_src>

<mosaic_0001>
module attributes {stable_mosaic.version = 11 : i64} {
  func.func @_mm_kernel_bias_1k(%arg0: i32, %arg1: i32, %arg2: memref<16x128xf32, #tpu.memory_space<vmem>>, %arg3: memref<128x128xf32, #tpu.memory_space<vmem>>, %arg4: memref<1x128xf32, #tpu.memory_space<vmem>>, %arg5: memref<16x128xf32, #tpu.memory_space<vmem>>) attributes {dimension_semantics = [#tpu.dimension_semantics<parallel>, #tpu.dimension_semantics<parallel>], iteration_bounds = array<i64: 1, 1>, scalar_prefetch = 0 : i64, scratch_operands = 0 : i64, tpu.core_type = #tpu.core_type<tc>, window_params = [{transform_indices = @transform_0, window_bounds = array<i64: 16, 128>}, {transform_indices = @transform_1, window_bounds = array<i64: 128, 128>}, {transform_indices = @transform_2, window_bounds = array<i64: 1, 128>}, {transform_indices = @transform_3, window_bounds = array<i64: 16, 128>}]} {
    %c0 = arith.constant 0 : index
    %c0_0 = arith.constant 0 : index
    %0 = vector.load %arg2[%c0, %c0_0] : memref<16x128xf32, #tpu.memory_space<vmem>>, vector<16x128xf32>
    %c0_1 = arith.constant 0 : index
    %c0_2 = arith.constant 0 : index
    %1 = vector.load %arg3[%c0_1, %c0_2] : memref<128x128xf32, #tpu.memory_space<vmem>>, vector<128x128xf32>
    %cst = arith.constant dense<0.000000e+00> : vector<16x128xf32>
    %2 = tpu.matmul %0, %1, %cst {dimension_numbers = #tpu.dot_dimension_numbers<[1], [0], [0], [1], [0, 0, 1, 1], [], []>} : vector<16x128xf32>, vector<128x128xf32>, vector<16x128xf32> -> vector<16x128xf32>
    %c0_3 = arith.constant 0 : index
    %c0_4 = arith.constant 0 : index
    %3 = vector.load %arg4[%c0_3, %c0_4] : memref<1x128xf32, #tpu.memory_space<vmem>>, vector<1x128xf32>
    %4 = vector.broadcast %3 : vector<1x128xf32> to vector<16x128xf32>
    %5 = arith.addf %2, %4 : vector<16x128xf32>
    %c0_5 = arith.constant 0 : index
    %c0_6 = arith.constant 0 : index
    %6 = vector.load %arg5[%c0_5, %c0_6] : memref<16x128xf32, #tpu.memory_space<vmem>>, vector<16x128xf32>
    tpu.vector_store %arg5[%c0_5, %c0_6], %5 {strides = array<i32>} : memref<16x128xf32, #tpu.memory_space<vmem>>, vector<16x128xf32>,
    return
  }
  func.func @transform_0(%arg0: i32, %arg1: i32) -> (i32, i32) {
    %c0_i32 = arith.constant 0 : i32
    %c0_i32_0 = arith.constant 0 : i32
    return %arg0, %c0_i32 : i32, i32
  }
  func.func @transform_1(%arg0: i32, %arg1: i32) -> (i32, i32) {
    %c0_i32 = arith.constant 0 : i32
    %c0_i32_0 = arith.constant 0 : i32
    return %c0_i32, %arg1 : i32, i32
  }
  func.func @transform_2(%arg0: i32, %arg1: i32) -> (i32, i32) {
    %c0_i32 = arith.constant 0 : i32
    %c0_i32_0 = arith.constant 0 : i32
    return %c0_i32, %arg1 : i32, i32
  }
  func.func @transform_3(%arg0: i32, %arg1: i32) -> (i32, i32) {
    %c0_i32 = arith.constant 0 : i32
    return %arg0, %arg1 : i32, i32
  }
}

</mosaic_0001>

<llo_original>
// kernel: tpu_custom_call.1
$region0: #{tpu_custom_call.1}
  #allocation0 [shape = 'u32[]', space=smem, size = 0x4, offset = 0x4, fixed_abs, tag = 'smem constant byte address 0x4 - core index']
  #allocation1 [shape = 'u32[144,128]{1,0:T(1,128)}', space=vmem, size = 0x12000, scoped, tag = 'internal scratch']
  %s0 = inlined_call_operand.hbm [shape: f32[16,128], index: 0, kind: input, shape index: {}]
  %s1 = inlined_call_operand.hbm [shape: f32[128,128], index: 1, kind: input, shape index: {}]
  %s2 = inlined_call_operand.vmem [shape: f32[1,128], index: 2, kind: input, shape index: {}]
  %s3 = inlined_call_operand.hbm [shape: f32[16,128], index: 3, kind: output, shape index: {}]
  %s4 = sld [smem:[#allocation0]]
  $region30: #{tpu_custom_call.1} parent=0
    _
  %s6 = ssub.s32 1, %s4
  %s7 = scalar_select 0, %s6, %s4
  $region1: #{tpu_custom_call.1} parent=0
    #allocation2 [shape = 'u8[8192]{0}', space=vmem, size = 0x2000, scoped, tag = 'input window, operand 0, single buffered']
    #allocation3 [shape = 's32[1]{0}', space=sflag, size = 0x4, scoped, tag = 'scoped memory for tpu_custom_call.1']
    #allocation4 [shape = 's32[1]{0}', space=sflag, size = 0x4, scoped, tag = 'scoped memory for tpu_custom_call.1']
    #allocation5 [shape = 'u8[65536]{0}', space=vmem, size = 0x10000, scoped, tag = 'input window, operand 1, single buffered']
    #allocation6 [shape = 's32[1]{0}', space=sflag, size = 0x4, scoped, tag = 'scoped memory for tpu_custom_call.1']
    #allocation7 [shape = 'u8[8192]{0}', space=vmem, size = 0x2000, scoped, tag = 'output window, operand 0, single buffered']
    %8 = vsyncpa [#allocation3], 0
    %9 = vsyncpa [#allocation6], 0
    %10 = vsyncpa [#allocation4], 0
    // Predicated region
    $region2: #{tpu_custom_call.1} parent=1 // pred_check
      _
    $region3: #{tpu_custom_call.1} parent=1 // pred_check_branch
      %12 = sbr.rel (0) target = $region5
    $region4: #{tpu_custom_call.1} parent=1 // pred_region
      %s14 = ssub.s32 256, 256
      %15 = vsyncadd [#allocation3], %s14
      %s16 = sshll.u32 [#allocation2], 4
      %s17 = int_to_ptr.vmem [resolvable:$true] %s16
      %22 = dma.hbm_to_vmem [thread:$0]  %s0, 256, %s17, [#allocation3], 128, 128, 8
    $region5: #{tpu_custom_call.1} parent=1 // pred_fallthru
      _
    // Predicated region
    $region6: #{tpu_custom_call.1} parent=1 // pred_check
      _
    $region7: #{tpu_custom_call.1} parent=1 // pred_check_branch
      %24 = sbr.rel (0) target = $region9
    $region8: #{tpu_custom_call.1} parent=1 // pred_region
      %s26 = ssub.s32 2048, 2048
      %27 = vsyncadd [#allocation6], %s26
      %s28 = sshll.u32 [#allocation5], 4
      %s29 = int_to_ptr.vmem [resolvable:$true] %s28
      %34 = dma.hbm_to_vmem [thread:$0]  %s1, 2048, %s29, [#allocation6], 128, 128, 8
    $region9: #{tpu_custom_call.1} parent=1 // pred_fallthru
      _
    // Predicated region
    $region10: #{tpu_custom_call.1} parent=1 // pred_check
      _
    $region11: #{tpu_custom_call.1} parent=1 // pred_check_branch
      %36 = sbr.rel (0) target = $region13
    $region12: #{tpu_custom_call.1} parent=1 // pred_region
      _
    $region13: #{tpu_custom_call.1} parent=1 // pred_fallthru
      _
    // Predicated region
    $region14: #{tpu_custom_call.1} parent=1 // pred_check
      _
    $region15: #{tpu_custom_call.1} parent=1 // pred_check_branch
      %38 = sbr.rel (0) target = $region17
    $region16: #{tpu_custom_call.1} parent=1 // pred_region
      %39 = dma.done [#allocation3], 256
    $region17: #{tpu_custom_call.1} parent=1 // pred_fallthru
      _
    // Predicated region
    $region18: #{tpu_custom_call.1} parent=1 // pred_check
      _
    $region19: #{tpu_custom_call.1} parent=1 // pred_check_branch
      %41 = sbr.rel (0) target = $region21
    $region20: #{tpu_custom_call.1} parent=1 // pred_region
      %42 = dma.done [#allocation6], 2048
    $region21: #{tpu_custom_call.1} parent=1 // pred_fallthru
      _
    %v43 = vld [vmem:[#allocation2] sm:$0xff]
    %v44 = vld [vmem:[#allocation2 + $0x8] sm:$0xff]
    %v45 = vld [vmem:[#allocation5] sm:$0xff]
    %v46 = vld [vmem:[#allocation5 + $0x8] sm:$0xff]
    %v47 = vld [vmem:[#allocation5 + $0x10] sm:$0xff]
    %v48 = vld [vmem:[#allocation5 + $0x18] sm:$0xff]
    %v49 = vld [vmem:[#allocation5 + $0x20] sm:$0xff]
    %v50 = vld [vmem:[#allocation5 + $0x28] sm:$0xff]
    %v51 = vld [vmem:[#allocation5 + $0x30] sm:$0xff]
    %v52 = vld [vmem:[#allocation5 + $0x38] sm:$0xff]
    %v53 = vld [vmem:[#allocation5 + $0x40] sm:$0xff]
    %v54 = vld [vmem:[#allocation5 + $0x48] sm:$0xff]
    %v55 = vld [vmem:[#allocation5 + $0x50] sm:$0xff]
    %v56 = vld [vmem:[#allocation5 + $0x58] sm:$0xff]
    %v57 = vld [vmem:[#allocation5 + $0x60] sm:$0xff]
    %v58 = vld [vmem:[#allocation5 + $0x68] sm:$0xff]
    %v59 = vld [vmem:[#allocation5 + $0x70] sm:$0xff]
    %v60 = vld [vmem:[#allocation5 + $0x78] sm:$0xff]
    %v61 = vld [vmem:[%s2] sm:$0x1]
    %v63 = vlaneseq
    %v64 = vshrl.u32 %v63, 7
    %v65 = vsub.s32 0, %v64
    %v66 = vrot.slane %v61, %v65
    %68 = vmatprep.subr.mxu0 0.0
    %69 = vmatpush1.msra.mxu0 %v45
    %70 = vmatprep.subr.mxu0 0.0
    %71 = vmatpush1.msra.mxu0 %v46
    %72 = vmatprep.subr.mxu0 0.0
    %73 = vmatpush1.msra.mxu0 %v47
    %74 = vmatprep.subr.mxu0 0.0
    %75 = vmatpush1.msra.mxu0 %v48
    %76 = vmatprep.subr.mxu0 0.0
    %77 = vmatpush1.msra.mxu0 %v49
    %78 = vmatprep.subr.mxu0 0.0
    %79 = vmatpush1.msra.mxu0 %v50
    %80 = vmatprep.subr.mxu0 0.0
    %81 = vmatpush1.msra.mxu0 %v51
    %82 = vmatprep.subr.mxu0 0.0
    %83 = vmatpush1.msra.mxu0 %v52
    %84 = vmatprep.subr.mxu0 0.0
    %85 = vmatpush1.msra.mxu0 %v53
    %86 = vmatprep.subr.mxu0 0.0
    %87 = vmatpush1.msra.mxu0 %v54
    %88 = vmatprep.subr.mxu0 0.0
    %89 = vmatpush1.msra.mxu0 %v55
    %90 = vmatprep.subr.mxu0 0.0
    %91 = vmatpush1.msra.mxu0 %v56
    %92 = vmatprep.subr.mxu0 0.0
    %93 = vmatpush1.msra.mxu0 %v57
    %94 = vmatprep.subr.mxu0 0.0
    %95 = vmatpush1.msra.mxu0 %v58
    %96 = vmatprep.subr.mxu0 0.0
    %97 = vmatpush1.msra.mxu0 %v59
    %98 = vmatprep.subr.mxu0 0.0
    %99 = vmatpush1.msra.mxu0 %v60
    %100 = vmatprep.subr.mxu0 0.0
    %101 = vmatpush1.msra.mxu0 0.0
    %102 = vmatprep.subr.mxu0 0.0
    %103 = vmatpush1.msra.mxu0 0.0
    %104 = vmatprep.subr.mxu0 0.0
    %105 = vmatpush1.msra.mxu0 0.0
    %106 = vmatprep.subr.mxu0 0.0
    %107 = vmatpush1.msra.mxu0 0.0
    %108 = vmatprep.subr.mxu0 0.0
    %109 = vmatpush1.msra.mxu0 0.0
    %110 = vmatprep.subr.mxu0 0.0
    %111 = vmatpush1.msra.mxu0 0.0
    %112 = vmatprep.subr.mxu0 0.0
    %113 = vmatpush1.msra.mxu0 0.0
    %114 = vmatprep.subr.mxu0 0.0
    %115 = vmatpush1.msra.mxu0 0.0
    %116 = vmatprep.subr.mxu0 0.0
    %117 = vmatpush1.msra.mxu0 0.0
    %118 = vmatprep.subr.mxu0 0.0
    %119 = vmatpush1.msra.mxu0 0.0
    %120 = vmatprep.subr.mxu0 0.0
    %121 = vmatpush1.msra.mxu0 0.0
    %122 = vmatprep.subr.mxu0 0.0
    %123 = vmatpush1.msra.mxu0 0.0
    %124 = vmatprep.subr.mxu0 0.0
    %125 = vmatpush1.msra.mxu0 0.0
    %126 = vmatprep.subr.mxu0 0.0
    %127 = vmatpush1.msra.mxu0 0.0
    %128 = vmatprep.subr.mxu0 0.0
    %129 = vmatpush1.msra.mxu0 0.0
    %130 = vmatprep.subr.mxu0 0.0
    %131 = vmatpush1.msra.mxu0 0.0
    %132 = vmatprep.mubr.f32.mxu0 0.0
    %133 = vmatmul.mubr.f32.gmra.mrb[0].mxu0 %v43
    %v134 = vpop.f32.mrb[0].mxu0
    %v135 = vadd.f32 %v66, %v134
    %v136 = vpop.f32.mrb[0].mxu0
    %137 = vmatprep.mubr.f32.mxu0 0.0
    %138 = vmatmul.mubr.f32.gmra.mrb[0].mxu0 %v44
    %v139 = vpop.f32.mrb[0].mxu0
    %v140 = vadd.f32 %v66, %v139
    %v141 = vpop.f32.mrb[0].mxu0
    %142 = vdwg.mxu0
    %143 = vst [vmem:[#allocation7] sm:$0xff] %v135
    %144 = vst [vmem:[#allocation7 + $0x8] sm:$0xff] %v140
    // Predicated region
    $region22: #{tpu_custom_call.1} parent=1 // pred_check
      _
    $region23: #{tpu_custom_call.1} parent=1 // pred_check_branch
      %146 = sbr.rel (0) target = $region25
    $region24: #{tpu_custom_call.1} parent=1 // pred_region
      %s148 = ssub.s32 256, 256
      %149 = vsyncadd [#allocation4], %s148
      %s150 = sshll.u32 [#allocation7], 4
      %s151 = int_to_ptr.vmem [resolvable:$true] %s150
      %156 = dma.vmem_to_hbm [thread:$0]  %s151, 256, %s3, [#allocation4], 128, 128, 8
    $region25: #{tpu_custom_call.1} parent=1 // pred_fallthru
      _
    // Predicated region
    $region26: #{tpu_custom_call.1} parent=1 // pred_check
      _
    $region27: #{tpu_custom_call.1} parent=1 // pred_check_branch
      %158 = sbr.rel (0) target = $region29
    $region28: #{tpu_custom_call.1} parent=1 // pred_region
      %159 = dma.done [#allocation4], 256
    $region29: #{tpu_custom_call.1} parent=1 // pred_fallthru
      _
    %160 = vsyncpa [#allocation3], 1
    %161 = vsyncpa [#allocation6], 1
    %162 = vsyncpa [#allocation4], 1

</llo_original>
